<compile_context>
chip_gen: v5e
topology: v5e:2x2
jax: 0.10.0
libtpu: 0.0.40
codegen_flags: <defaults>
</compile_context>

<pallas_src>
import jax
import jax.numpy as jnp
from jax import lax
from jax.experimental import pallas as pl
from jax.experimental.pallas import tpu as pltpu


def _round_up(x, m):
    return ((x + m - 1) // m) * m


def _classifier_kernel(x_ref, w1_ref, b1_ref, w2_ref, b2_ref, out_ref, acc_ref):
    # x_ref  : [tm, tk]   f32 flattened-input tile
    # w1_ref : [E,  tk]   f32 embedding Linear weight tile, PyTorch [out, in] layout
    # b1_ref : [1,  E]    f32
    # w2_ref : [Cp, E]    f32 fc weight (class-padded), PyTorch [out, in] layout
    # b2_ref : [1,  Cp]   f32
    # out_ref: [tm, Cp]   f32 logits (lane-dense, class-padded)
    # acc_ref: [tm, E]    f32 accumulator, persists across the F grid axis
    k = pl.program_id(1)

    @pl.when(k == 0)
    def _():
        acc_ref[...] = jnp.zeros_like(acc_ref)

    # Dominant matmul: bf16 operands, f32 accumulation on the MXU.  Contract the
    # last dim of both operands so w1 never needs a materialized transpose.
    x_t = x_ref[...].astype(jnp.bfloat16)
    w1_t = w1_ref[...].astype(jnp.bfloat16)
    acc_ref[...] += lax.dot_general(
        x_t, w1_t,
        dimension_numbers=(((1,), (1,)), ((), ())),
        preferred_element_type=jnp.float32)

    # Epilogue on the last F step only: bias + ReLU + tiny fc matmul + bias.
    @pl.when(k == pl.num_programs(1) - 1)
    def _():
        h = jnp.maximum(acc_ref[...] + b1_ref[...], 0.0)          # f32 epilogue
        logits = lax.dot_general(
            h, w2_ref[...],
            dimension_numbers=(((1,), (1,)), ((), ())),
            preferred_element_type=jnp.float32) + b2_ref[...]
        out_ref[...] = logits.astype(out_ref.dtype)


def multilabel_classifier(x_nchw, w_emb, b_emb, w_fc, b_fc, *, tk=512):
    """Forward pass of MultiLabelClassifer.

    x_nchw : [B, C, H, W] float32
    w_emb  : [E, C*H*W]   embedding Linear weight (PyTorch [out, in] layout)
    b_emb  : [E]
    w_fc   : [num_class, E]  fc weight (PyTorch [out, in] layout)
    b_fc   : [num_class]
    returns: [B, num_class] float32 logits
    """
    B = x_nchw.shape[0]
    F = x_nchw.shape[1] * x_nchw.shape[2] * x_nchw.shape[3]
    E = w_emb.shape[0]
    C = w_fc.shape[0]

    # Lane/sublane-friendly padded problem sizes.
    tm = max(8, min(128, _round_up(B, 8)))      # batch (sublane) tile
    tk = min(tk, _round_up(F, 128))             # F reduction (lane) tile, 128-multiple
    Bp = _round_up(B, tm)
    Fp = _round_up(F, tk)
    Cp = _round_up(C, 128)                      # lane-dense class dimension

    # Glue (no transposes): flatten NCHW, zero-pad to tile multiples.  Zero pads
    # contribute nothing to the reduction, so semantics are unchanged.
    x_p = jnp.pad(x_nchw.reshape(B, F), ((0, Bp - B), (0, Fp - F)))
    w1_p = jnp.pad(w_emb, ((0, 0), (0, Fp - F)))          # [E, Fp], still [out, in]
    b1_p = b_emb.reshape(1, E)
    w2_p = jnp.pad(w_fc, ((0, Cp - C), (0, 0)))           # [Cp, E], still [out, in]
    b2_p = jnp.pad(b_fc, (0, Cp - C)).reshape(1, Cp)

    grid = (Bp // tm, Fp // tk)
    flops = 2 * Bp * Fp * E + 2 * Bp * E * Cp
    bytes_accessed = 4 * (Bp * Fp + E * Fp + Cp * E + Bp * Cp + E + Cp)

    out_p = pl.pallas_call(
        _classifier_kernel,
        out_shape=jax.ShapeDtypeStruct((Bp, Cp), jnp.float32),
        grid_spec=pltpu.PrefetchScalarGridSpec(
            num_scalar_prefetch=0,
            grid=grid,
            in_specs=[
                pl.BlockSpec((tm, tk), lambda i, k: (i, k)),   # x tile
                pl.BlockSpec((E, tk), lambda i, k: (0, k)),    # w1 streamed over F
                pl.BlockSpec((1, E), lambda i, k: (0, 0)),     # b1 (resident)
                pl.BlockSpec((Cp, E), lambda i, k: (0, 0)),    # w2 (resident)
                pl.BlockSpec((1, Cp), lambda i, k: (0, 0)),    # b2 (resident)
            ],
            out_specs=pl.BlockSpec((tm, Cp), lambda i, k: (i, 0)),
            scratch_shapes=[pltpu.VMEM((tm, E), jnp.float32)],
        ),
        compiler_params=pltpu.CompilerParams(
            dimension_semantics=("parallel", "arbitrary"),
            vmem_limit_bytes=32 * 1024 * 1024,
        ),
        cost_estimate=pl.CostEstimate(
            flops=flops, bytes_accessed=bytes_accessed, transcendentals=0),
    )(x_p, w1_p, b1_p, w2_p, b2_p)

    return out_p[:B, :C]


if __name__ == "__main__":
    # Small shapes consistent with the module's forward:
    #   batch=2, channels=4, spatial=16x16, embedding_size=32, num_class=10
    B, C, H, W = 2, 4, 16, 16
    embedding_size = 32
    num_class = 10
    F = C * H * W

    key = jax.random.PRNGKey(0)
    k_x, k_w1, k_b1, k_w2, k_b2 = jax.random.split(key, 5)

    x = jax.random.normal(k_x, (B, C, H, W), dtype=jnp.float32)
    # Deterministic "module parameters" (synthetic init, like nn.Linear's).
    w_emb = jax.random.normal(k_w1, (embedding_size, F), dtype=jnp.float32) * (1.0 / F ** 0.5)
    b_emb = jax.random.normal(k_b1, (embedding_size,), dtype=jnp.float32) * 0.01
    w_fc = jax.random.normal(k_w2, (num_class, embedding_size), dtype=jnp.float32) * (1.0 / embedding_size ** 0.5)
    b_fc = jax.random.normal(k_b2, (num_class,), dtype=jnp.float32) * 0.01

    out = multilabel_classifier(x, w_emb, b_emb, w_fc, b_fc)
    out = jax.block_until_ready(out)

    # Pure-JAX f32 reference of the same forward semantics.
    ref_h = jnp.maximum(x.reshape(B, F) @ w_emb.T + b_emb, 0.0)
    ref = ref_h @ w_fc.T + b_fc
    assert out.shape == (B, num_class)
    # bf16 MXU operands with f32 accumulation -> relax tolerance vs the f32 reference.
    assert jnp.allclose(out, ref, atol=3e-2, rtol=3e-2), float(jnp.max(jnp.abs(out - ref)))

    print("KERNEL_OK")
</pallas_src>

<mosaic_0001>
module attributes {stable_mosaic.version = 11 : i64} {
  func.func @_classifier_kernel(%arg0: i32, %arg1: i32, %arg2: memref<8x512xf32, #tpu.memory_space<vmem>>, %arg3: memref<32x512xf32, #tpu.memory_space<vmem>>, %arg4: memref<1x32xf32, #tpu.memory_space<vmem>>, %arg5: memref<128x32xf32, #tpu.memory_space<vmem>>, %arg6: memref<1x128xf32, #tpu.memory_space<vmem>>, %arg7: memref<8x128xf32, #tpu.memory_space<vmem>>, %arg8: memref<8x32xf32, #tpu.memory_space<vmem>>) attributes {dimension_semantics = [#tpu.dimension_semantics<parallel>, #tpu.dimension_semantics<arbitrary>], iteration_bounds = array<i64: 1, 2>, scalar_prefetch = 0 : i64, scratch_operands = 1 : i64, tpu.core_type = #tpu.core_type<tc>, window_params = [{transform_indices = @transform_0, window_bounds = array<i64: 8, 512>}, {transform_indices = @transform_1, window_bounds = array<i64: 32, 512>}, {pipeline_mode = #tpu.pipeline_mode<synchronous>, transform_indices = @transform_2, window_bounds = array<i64: 1, 32>}, {pipeline_mode = #tpu.pipeline_mode<synchronous>, transform_indices = @transform_3, window_bounds = array<i64: 128, 32>}, {pipeline_mode = #tpu.pipeline_mode<synchronous>, transform_indices = @transform_4, window_bounds = array<i64: 1, 128>}, {transform_indices = @transform_5, window_bounds = array<i64: 8, 128>}]} {
    %c0_i32 = arith.constant 0 : i32
    %0 = arith.cmpi eq, %arg1, %c0_i32 : i32
    %1 = arith.extui %0 : i1 to i32
    %c0_i32_0 = arith.constant 0 : i32
    %2 = arith.cmpi ne, %1, %c0_i32_0 : i32
    scf.if %2 {
      %cst_9 = arith.constant 0.000000e+00 : f32
      %14 = vector.broadcast %cst_9 : f32 to vector<8x32xf32>
      %c0_10 = arith.constant 0 : index
      %c0_11 = arith.constant 0 : index
      %15 = vector.load %arg8[%c0_10, %c0_11] : memref<8x32xf32, #tpu.memory_space<vmem>>, vector<8x32xf32>
      tpu.vector_store %arg8[%c0_10, %c0_11], %14 {strides = array<i32>} : memref<8x32xf32, #tpu.memory_space<vmem>>, vector<8x32xf32>,
    } else {
    }
    %c0 = arith.constant 0 : index
    %c0_1 = arith.constant 0 : index
    %3 = vector.load %arg2[%c0, %c0_1] : memref<8x512xf32, #tpu.memory_space<vmem>>, vector<8x512xf32>
    %4 = arith.truncf %3 : vector<8x512xf32> to vector<8x512xbf16>
    %c0_2 = arith.constant 0 : index
    %c0_3 = arith.constant 0 : index
    %5 = vector.load %arg3[%c0_2, %c0_3] : memref<32x512xf32, #tpu.memory_space<vmem>>, vector<32x512xf32>
    %6 = arith.truncf %5 : vector<32x512xf32> to vector<32x512xbf16>
    %c0_4 = arith.constant 0 : index
    %c0_5 = arith.constant 0 : index
    %7 = vector.load %arg8[%c0_4, %c0_5] : memref<8x32xf32, #tpu.memory_space<vmem>>, vector<8x32xf32>
    %cst = arith.constant dense<0.000000e+00> : vector<8x32xf32>
    %8 = tpu.matmul %4, %6, %cst {dimension_numbers = #tpu.dot_dimension_numbers<[1], [1], [0], [0], [0, 0, 1, 0], [], []>} : vector<8x512xbf16>, vector<32x512xbf16>, vector<8x32xf32> -> vector<8x32xf32>
    %9 = arith.addf %7, %8 : vector<8x32xf32>
    %c0_6 = arith.constant 0 : index
    %c0_7 = arith.constant 0 : index
    %10 = vector.load %arg8[%c0_6, %c0_7] : memref<8x32xf32, #tpu.memory_space<vmem>>, vector<8x32xf32>
    tpu.vector_store %arg8[%c0_6, %c0_7], %9 {strides = array<i32>} : memref<8x32xf32, #tpu.memory_space<vmem>>, vector<8x32xf32>,
    %c1_i32 = arith.constant 1 : i32
    %11 = arith.cmpi eq, %arg1, %c1_i32 : i32
    %12 = arith.extui %11 : i1 to i32
    %c0_i32_8 = arith.constant 0 : i32
    %13 = arith.cmpi ne, %12, %c0_i32_8 : i32
    scf.if %13 {
      %c0_9 = arith.constant 0 : index
      %c0_10 = arith.constant 0 : index
      %14 = vector.load %arg8[%c0_9, %c0_10] : memref<8x32xf32, #tpu.memory_space<vmem>>, vector<8x32xf32>
      %c0_11 = arith.constant 0 : index
      %c0_12 = arith.constant 0 : index
      %15 = vector.load %arg4[%c0_11, %c0_12] : memref<1x32xf32, #tpu.memory_space<vmem>>, vector<1x32xf32>
      %16 = vector.broadcast %15 : vector<1x32xf32> to vector<8x32xf32>
      %17 = arith.addf %14, %16 : vector<8x32xf32>
      %cst_13 = arith.constant 0.000000e+00 : f32
      %18 = vector.broadcast %cst_13 : f32 to vector<8x32xf32>
      %19 = arith.maximumf %17, %18 : vector<8x32xf32>
      %c0_14 = arith.constant 0 : index
      %c0_15 = arith.constant 0 : index
      %20 = vector.load %arg5[%c0_14, %c0_15] : memref<128x32xf32, #tpu.memory_space<vmem>>, vector<128x32xf32>
      %cst_16 = arith.constant dense<0.000000e+00> : vector<8x128xf32>
      %21 = tpu.matmul %19, %20, %cst_16 {dimension_numbers = #tpu.dot_dimension_numbers<[1], [1], [0], [0], [0, 0, 1, 0], [], []>} : vector<8x32xf32>, vector<128x32xf32>, vector<8x128xf32> -> vector<8x128xf32>
      %c0_17 = arith.constant 0 : index
      %c0_18 = arith.constant 0 : index
      %22 = vector.load %arg6[%c0_17, %c0_18] : memref<1x128xf32, #tpu.memory_space<vmem>>, vector<1x128xf32>
      %23 = vector.broadcast %22 : vector<1x128xf32> to vector<8x128xf32>
      %24 = arith.addf %21, %23 : vector<8x128xf32>
      %c0_19 = arith.constant 0 : index
      %c0_20 = arith.constant 0 : index
      %25 = vector.load %arg7[%c0_19, %c0_20] : memref<8x128xf32, #tpu.memory_space<vmem>>, vector<8x128xf32>
      tpu.vector_store %arg7[%c0_19, %c0_20], %24 {strides = array<i32>} : memref<8x128xf32, #tpu.memory_space<vmem>>, vector<8x128xf32>,
    } else {
    }
    return
  }
  func.func @transform_0(%arg0: i32, %arg1: i32) -> (i32, i32) {
    %c0_i32 = arith.constant 0 : i32
    return %arg0, %arg1 : i32, i32
  }
  func.func @transform_1(%arg0: i32, %arg1: i32) -> (i32, i32) {
    %c0_i32 = arith.constant 0 : i32
    %c0_i32_0 = arith.constant 0 : i32
    return %c0_i32, %arg1 : i32, i32
  }
  func.func @transform_2(%arg0: i32, %arg1: i32) -> (i32, i32) {
    %c0_i32 = arith.constant 0 : i32
    %c0_i32_0 = arith.constant 0 : i32
    %c0_i32_1 = arith.constant 0 : i32
    return %c0_i32, %c0_i32_0 : i32, i32
  }
  func.func @transform_3(%arg0: i32, %arg1: i32) -> (i32, i32) {
    %c0_i32 = arith.constant 0 : i32
    %c0_i32_0 = arith.constant 0 : i32
    %c0_i32_1 = arith.constant 0 : i32
    return %c0_i32, %c0_i32_0 : i32, i32
  }
  func.func @transform_4(%arg0: i32, %arg1: i32) -> (i32, i32) {
    %c0_i32 = arith.constant 0 : i32
    %c0_i32_0 = arith.constant 0 : i32
    %c0_i32_1 = arith.constant 0 : i32
    return %c0_i32, %c0_i32_0 : i32, i32
  }
  func.func @transform_5(%arg0: i32, %arg1: i32) -> (i32, i32) {
    %c0_i32 = arith.constant 0 : i32
    %c0_i32_0 = arith.constant 0 : i32
    return %arg0, %c0_i32 : i32, i32
  }
}

</mosaic_0001>

<llo_original>
// kernel: tpu_custom_call.1
$region0: #{tpu_custom_call.1}
  #allocation0 [shape = 'u32[]', space=smem, size = 0x4, offset = 0x4, fixed_abs, tag = 'smem constant byte address 0x4 - core index']
  #allocation1 [shape = 'u32[72,128]{1,0:T(1,128)}', space=vmem, size = 0x9000, scoped, tag = 'internal scratch']
  #allocation2 [shape = 'f32[8,32]{1,0:T(8,128)}', space=vmem, size = 0x1000, scoped, tag = 'scratch operand']
  %s0 = inlined_call_operand.vmem [shape: f32[8,1024], index: 0, kind: input, shape index: {}]
  %s1 = inlined_call_operand.hbm [shape: f32[32,1024], index: 1, kind: input, shape index: {}]
  %s2 = inlined_call_operand.vmem [shape: f32[1,32], index: 2, kind: input, shape index: {}]
  %s3 = inlined_call_operand.vmem [shape: f32[128,32], index: 3, kind: input, shape index: {}]
  %s4 = inlined_call_operand.vmem [shape: f32[1,128], index: 4, kind: input, shape index: {}]
  %s5 = inlined_call_operand.hbm [shape: f32[8,128], index: 5, kind: output, shape index: {}]
  %s6 = sld [smem:[#allocation0]]
  $region65: #{tpu_custom_call.1} parent=0
    _
  %s8 = ssub.s32 1, %s6
  %s9 = scalar_select 0, %s8, %s6
  $region1: #{tpu_custom_call.1} parent=0
    #allocation3 [shape = 'u8[131072]{0}', space=vmem, size = 0x20000, scoped, tag = 'input window, operand 1']
    #allocation4 [shape = 's32[2]{0}', space=sflag, size = 0x8, scoped, tag = 'scoped memory for tpu_custom_call.1']
    #allocation5 [shape = 's32[2]{0}', space=sflag, size = 0x8, scoped, tag = 'scoped memory for tpu_custom_call.1']
    #allocation6 [shape = 'u8[4096]{0}', space=vmem, size = 0x1000, scoped, tag = 'output window, operand 0, single buffered']
    %10 = vsyncpa [#allocation4], 0
    %s11 = scalar_lea.sflag [#allocation4], 1
    %12 = vsyncpa %s11, 0
    %13 = vsyncpa [#allocation5], 0
    loop: start=0, step=1, limit=4
    $region2: #{tpu_custom_call.1} parent=1 // loop_pre_header
      _
    $region3: #{tpu_custom_call.1} parent=1 // loop_header
      %s15 = sphi 0, %s19
      %p16 = scmp.ge.s32.totalorder %s15, 4
      %s22 = sphi 0, %s34
      %s23 = sphi 0, %s30
      %s24 = sphi 0, %s22
      %s25 = sphi 0, %s23
      %s26 = sphi 0, %s24
      %s27 = sphi 0, %s25
      %s39 = sphi 0, %s41
      %s42 = sphi 0, %s39
      %s43 = sphi 0, %s42
      %s59 = sphi 0, %s43
      %s65 = sphi 0, %s67
      %s68 = sphi 0, %s65
      %s69 = sphi 0, %s68
      %s85 = sphi 0, %s69
      %s89 = sphi 0, %s89
      %s91 = sphi 0, %s89
      %s92 = sphi 0, %s91
      %s106 = sphi 0, %s92
      %s110 = sphi 0, %s110
      %s112 = sphi 0, %s110
      %s113 = sphi 0, %s112
      %s127 = sphi 0, %s113
      %s131 = sphi 0, %s131
      %s133 = sphi 0, %s131
      %s134 = sphi 0, %s133
      %s148 = sphi 0, %s134
      %s154 = sphi 0, %s156
      %s157 = sphi 0, %s154
      %s158 = sphi 0, %s157
      %s174 = sphi 0, %s158
    $region4: #{tpu_custom_call.1} parent=1 // loop_header_branch
      %18 = sbr.rel (%p16) target = $region8
    $region5: #{tpu_custom_call.1} parent=1 // loop_body
      %s20 = ssub.s32 %s15, 1
      %s21 = ssub.s32 %s15, 2
      %s28 = sadd.s32 1, %s23
      %p29 = scmp.ge.s32.totalorder %s28, 2
      %s30 = scalar_select %p29, 0, %s28
      %s31 = sadd.s32 1, %s22
      %s32 = scalar_select %p29, %s31, %s22
      %p33 = scmp.ge.s32.totalorder %s32, 1
      %s34 = scalar_select %p33, 0, %s32
      %s35 = ssub.s32 %s22, %s34
      %s36 = ssub.s32 %s23, %s30
      %s37 = sor.u32 %s35, %s36
      %p38 = scmp.eq.s32.totalorder %s37, 0
      %s40 = sadd.s32 %s39, 1
      %s41 = scalar_select %p38, %s39, %s40
      %p44 = pneg %p38
      %p45 = scmp.eq.s32.totalorder %s15, 1
      %p46 = por %p44, %p45
      %p47 = scmp.ne.s32.totalorder %s39, %s42
      %p48 = scmp.eq.s32.totalorder %s15, 0
      %p49 = por %p47, %p48
      %p50 = scmp.ne.s32.totalorder %s39, %s42
      %p51 = scmp.eq.s32.totalorder %s20, 1
      %p52 = por %p50, %p51
      %p53 = scmp.ne.s32.totalorder %s42, %s43
      %p54 = scmp.eq.s32.totalorder %s20, 0
      %p55 = por %p53, %p54
      %p56 = scmp.ne.s32.totalorder %s42, %s43
      %p57 = scmp.eq.s32.totalorder %s21, 1
      %p58 = por %p56, %p57
      %p60 = scmp.ne.s32.totalorder %s43, %s59
      %p61 = scmp.eq.s32.totalorder %s21, 0
      %p62 = por %p60, %p61
      %s63 = ssub.s32 %s23, %s30
      %p64 = scmp.eq.s32.totalorder %s63, 0
      %s66 = sadd.s32 %s65, 1
      %s67 = scalar_select %p64, %s65, %s66
      %p70 = pneg %p64
      %p71 = scmp.eq.s32.totalorder %s15, 1
      %p72 = por %p70, %p71
      %p73 = scmp.ne.s32.totalorder %s65, %s68
      %p74 = scmp.eq.s32.totalorder %s15, 0
      %p75 = por %p73, %p74
      %p76 = scmp.ne.s32.totalorder %s65, %s68
      %p77 = scmp.eq.s32.totalorder %s20, 1
      %p78 = por %p76, %p77
      %p79 = scmp.ne.s32.totalorder %s68, %s69
      %p80 = scmp.eq.s32.totalorder %s20, 0
      %p81 = por %p79, %p80
      %p82 = scmp.ne.s32.totalorder %s68, %s69
      %p83 = scmp.eq.s32.totalorder %s21, 1
      %p84 = por %p82, %p83
      %p86 = scmp.ne.s32.totalorder %s69, %s85
      %p87 = scmp.eq.s32.totalorder %s21, 0
      %p88 = por %p86, %p87
      %s90 = sadd.s32 %s89, 1
      %p93 = scmp.eq.s32.totalorder %s15, 1
      %p94 = scmp.ne.s32.totalorder %s89, %s91
      %p95 = scmp.eq.s32.totalorder %s15, 0
      %p96 = por %p94, %p95
      %p97 = scmp.ne.s32.totalorder %s89, %s91
      %p98 = scmp.eq.s32.totalorder %s20, 1
      %p99 = por %p97, %p98
      %p100 = scmp.ne.s32.totalorder %s91, %s92
      %p101 = scmp.eq.s32.totalorder %s20, 0
      %p102 = por %p100, %p101
      %p103 = scmp.ne.s32.totalorder %s91, %s92
      %p104 = scmp.eq.s32.totalorder %s21, 1
      %p105 = por %p103, %p104
      %p107 = scmp.ne.s32.totalorder %s92, %s106
      %p108 = scmp.eq.s32.totalorder %s21, 0
      %p109 = por %p107, %p108
      %s111 = sadd.s32 %s110, 1
      %p114 = scmp.eq.s32.totalorder %s15, 1
      %p115 = scmp.ne.s32.totalorder %s110, %s112
      %p116 = scmp.eq.s32.totalorder %s15, 0
      %p117 = por %p115, %p116
      %p118 = scmp.ne.s32.totalorder %s110, %s112
      %p119 = scmp.eq.s32.totalorder %s20, 1
      %p120 = por %p118, %p119
      %p121 = scmp.ne.s32.totalorder %s112, %s113
      %p122 = scmp.eq.s32.totalorder %s20, 0
      %p123 = por %p121, %p122
      %p124 = scmp.ne.s32.totalorder %s112, %s113
      %p125 = scmp.eq.s32.totalorder %s21, 1
      %p126 = por %p124, %p125
      %p128 = scmp.ne.s32.totalorder %s113, %s127
      %p129 = scmp.eq.s32.totalorder %s21, 0
      %p130 = por %p128, %p129
      %s132 = sadd.s32 %s131, 1
      %p135 = scmp.eq.s32.totalorder %s15, 1
      %p136 = scmp.ne.s32.totalorder %s131, %s133
      %p137 = scmp.eq.s32.totalorder %s15, 0
      %p138 = por %p136, %p137
      %p139 = scmp.ne.s32.totalorder %s131, %s133
      %p140 = scmp.eq.s32.totalorder %s20, 1
      %p141 = por %p139, %p140
      %p142 = scmp.ne.s32.totalorder %s133, %s134
      %p143 = scmp.eq.s32.totalorder %s20, 0
      %p144 = por %p142, %p143
      %p145 = scmp.ne.s32.totalorder %s133, %s134
      %p146 = scmp.eq.s32.totalorder %s21, 1
      %p147 = por %p145, %p146
      %p149 = scmp.ne.s32.totalorder %s134, %s148
      %p150 = scmp.eq.s32.totalorder %s21, 0
      %p151 = por %p149, %p150
      %s152 = ssub.s32 %s22, %s34
      %p153 = scmp.eq.s32.totalorder %s152, 0
      %s155 = sadd.s32 %s154, 1
      %s156 = scalar_select %p153, %s154, %s155
      %p159 = pneg %p153
      %p160 = scmp.eq.s32.totalorder %s15, 1
      %p161 = por %p159, %p160
      %p162 = scmp.ne.s32.totalorder %s154, %s157
      %p163 = scmp.eq.s32.totalorder %s15, 0
      %p164 = por %p162, %p163
      %p165 = scmp.ne.s32.totalorder %s154, %s157
      %p166 = scmp.eq.s32.totalorder %s20, 1
      %p167 = por %p165, %p166
      %p168 = scmp.ne.s32.totalorder %s157, %s158
      %p169 = scmp.eq.s32.totalorder %s20, 0
      %p170 = por %p168, %p169
      %p171 = scmp.ne.s32.totalorder %s157, %s158
      %p172 = scmp.eq.s32.totalorder %s21, 1
      %p173 = por %p171, %p172
      %p175 = scmp.ne.s32.totalorder %s158, %s174
      %p176 = scmp.eq.s32.totalorder %s21, 0
      %p177 = por %p175, %p176
      %p178 = scmp.le.s32.totalorder 1, %s15
      %p179 = scmp.lt.s32.totalorder %s15, 3
      %p180 = pnand %p178, %p179
      %p181 = pneg %p180
      // Predicated region
      $region9: #{tpu_custom_call.1} parent=5 // pred_check
        _
      $region10: #{tpu_custom_call.1} parent=5 // pred_check_branch
        %183 = sbr.rel (%p180) target = $region12
      $region11: #{tpu_custom_call.1} parent=5 // pred_region
        %s184 = ssub.s32 %s15, 1
        // Predicated region
        $region13: #{tpu_custom_call.1} parent=11 // pred_check
          %p185 = pneg %p102
        $region14: #{tpu_custom_call.1} parent=11 // pred_check_branch
          %187 = sbr.rel (%p185) target = $region16
        $region15: #{tpu_custom_call.1} parent=11 // pred_region
          _
        $region16: #{tpu_custom_call.1} parent=11 // pred_fallthru
          _
        // Predicated region
        $region17: #{tpu_custom_call.1} parent=11 // pred_check
          %p188 = pneg %p123
        $region18: #{tpu_custom_call.1} parent=11 // pred_check_branch
          %190 = sbr.rel (%p188) target = $region20
        $region19: #{tpu_custom_call.1} parent=11 // pred_region
          _
        $region20: #{tpu_custom_call.1} parent=11 // pred_fallthru
          _
        // Predicated region
        $region21: #{tpu_custom_call.1} parent=11 // pred_check
          %p191 = pneg %p144
        $region22: #{tpu_custom_call.1} parent=11 // pred_check_branch
          %193 = sbr.rel (%p191) target = $region24
        $region23: #{tpu_custom_call.1} parent=11 // pred_region
          _
        $region24: #{tpu_custom_call.1} parent=11 // pred_fallthru
          _
      $region12: #{tpu_custom_call.1} parent=5 // pred_fallthru
        _
      %p194 = scmp.lt.s32.totalorder %s15, 2
      // Predicated region
      $region25: #{tpu_custom_call.1} parent=5 // pred_check
        %p195 = pneg %p194
      $region26: #{tpu_custom_call.1} parent=5 // pred_check_branch
        %197 = sbr.rel (%p195) target = $region28
      $region27: #{tpu_custom_call.1} parent=5 // pred_region
        // Predicated region
        $region29: #{tpu_custom_call.1} parent=27 // pred_check
          %p198 = pneg %p49
        $region30: #{tpu_custom_call.1} parent=27 // pred_check_branch
          %200 = sbr.rel (%p198) target = $region32
        $region31: #{tpu_custom_call.1} parent=27 // pred_region
          %s201 = smul.u32 4, %s23
          %p202 = scmp.lt.s32.totalorder %s22, 0
          %s203 = scalar_select %p202, %s22, 0
          %p204 = scmp.lt.s32.totalorder %s201, 7
          %s205 = scalar_select %p204, %s201, 7
          %s206 = smul.addr %s203, 8
          %s207 = sadd.s32 %s205, %s206
          %s208 = smul.addr %s207, 8
          %s209 = scalar_lea.vmem %s0, %s208
          %s210 = smul.u32 4, %s23
        $region32: #{tpu_custom_call.1} parent=27 // pred_fallthru
          _
        // Predicated region
        $region33: #{tpu_custom_call.1} parent=27 // pred_check
          %p211 = pneg %p75
        $region34: #{tpu_custom_call.1} parent=27 // pred_check_branch
          %213 = sbr.rel (%p211) target = $region36
        $region35: #{tpu_custom_call.1} parent=27 // pred_region
          %s214 = sand.u32 %s65, 1
          %s215 = scalar_lea.sflag [#allocation4], %s214
          %s216 = sand.u32 %s65, 1
          %s217 = smul.addr %s216, 128
          %s218 = scalar_lea.vmem [#allocation3], %s217
          %s219 = smul.u32 4, %s23
          %221 = vsyncadd %s215, 0
          %s222 = smul.addr %s219, 8
          %s223 = scalar_lea.hbm %s1, %s222
          %s224 = sshll.u32 %s223, 4
          %s225 = int_to_ptr.hbm [resolvable:$true] %s224
          %s226 = sshll.u32 %s218, 4
          %s227 = int_to_ptr.vmem [resolvable:$true] %s226
          %232 = dma.hbm_to_vmem [thread:$0]  %s225, 2048, %s227, %s215, 1024, 512, 32
        $region36: #{tpu_custom_call.1} parent=27 // pred_fallthru
          _
      $region28: #{tpu_custom_call.1} parent=5 // pred_fallthru
        _
      %p233 = scmp.le.s32.totalorder 1, %s15
      %p234 = scmp.lt.s32.totalorder %s15, 3
      %p235 = pnand %p233, %p234
      %p236 = pneg %p235
      // Predicated region
      $region37: #{tpu_custom_call.1} parent=5 // pred_check
        _
      $region38: #{tpu_custom_call.1} parent=5 // pred_check_branch
        %238 = sbr.rel (%p235) target = $region40
      $region39: #{tpu_custom_call.1} parent=5 // pred_region
        %s239 = ssub.s32 %s15, 1
        %s240 = sand.u32 %s68, 1
        %s241 = scalar_lea.sflag [#allocation4], %s240
        %s242 = sand.u32 %s68, 1
        %s243 = smul.addr %s242, 128
        %s244 = scalar_lea.vmem [#allocation3], %s243
        // Predicated region
        $region41: #{tpu_custom_call.1} parent=39 // pred_check
          %p245 = pneg %p81
        $region42: #{tpu_custom_call.1} parent=39 // pred_check_branch
          %247 = sbr.rel (%p245) target = $region44
        $region43: #{tpu_custom_call.1} parent=39 // pred_region
          %249 = dma.done %s241, 2048
        $region44: #{tpu_custom_call.1} parent=39 // pred_fallthru
          _
        %s250 = smul.u32 4, %s25
        %p251 = scmp.lt.s32.totalorder %s24, 0
        %s252 = scalar_select %p251, %s24, 0
        %p253 = scmp.lt.s32.totalorder %s250, 7
        %s254 = scalar_select %p253, %s250, 7
        %s255 = smul.addr %s252, 8
        %s256 = sadd.s32 %s254, %s255
        %s257 = smul.addr %s256, 8
        %s258 = scalar_lea.vmem %s0, %s257
        %p259 = pneg %p55
        %p260 = pneg %p52
        %s261 = sand.u32 %s68, 1
        %s262 = scalar_lea.sflag [#allocation4], %s261
        %s263 = sand.u32 %s68, 1
        %s264 = smul.addr %s263, 128
        %s265 = scalar_lea.vmem [#allocation3], %s264
        %p266 = pneg %p81
        %p267 = pneg %p78
        %p268 = pneg %p102
        %p269 = pneg %p99
        %p270 = pneg %p123
        %p271 = pneg %p120
        %p272 = pneg %p144
        %p273 = pneg %p141
        %p274 = pneg %p170
        %p275 = pneg %p167
        %s276 = smul.u32 4, %s25
        %p277 = scmp.lt.s32.totalorder %s24, 0
        %s278 = scalar_select %p277, %s24, 0
        %p279 = scmp.lt.s32.totalorder %s276, 7
        %s280 = scalar_select %p279, %s276, 7
        %s281 = smul.addr %s278, 8
        %s282 = sadd.s32 %s280, %s281
        %s283 = smul.addr %s282, 8
        %s284 = scalar_lea.vmem %s0, %s283
        %s285 = smul.u32 4, %s25
        %s286 = smul.u32 4, %s25
        %p288 = scmp.eq.s32.totalorder %s25, 0
        // Predicated region
        $region45: #{tpu_custom_call.1} parent=39 // pred_check
          %p289 = pneg %p288
        $region46: #{tpu_custom_call.1} parent=39 // pred_check_branch
          %291 = sbr.rel (%p289) target = $region48
        $region47: #{tpu_custom_call.1} parent=39 // pred_region
          %vm292 = vcmask 261120
          %293 = vst.msk [vmem:[#allocation2] sm:$0xff] %vm292, 0.0
        $region48: #{tpu_custom_call.1} parent=39 // pred_fallthru
          _
        %v294 = vld [vmem:[%s284] sm:$0xff]
        %v295 = vld [vmem:[%s284 + $0x8] sm:$0xff]
        %v296 = vld [vmem:[%s284 + $0x10] sm:$0xff]
        %v297 = vld [vmem:[%s284 + $0x18] sm:$0xff]
        %v298 = vpack.c.bf16 %v294, %v294
        %v299 = vpack.c.bf16 %v295, %v295
        %v300 = vpack.c.bf16 %v296, %v296
        %v301 = vpack.c.bf16 %v297, %v297
        %v302 = vld [vmem:[%s244] sm:$0xff]
        %v303 = vld [vmem:[%s244 + $0x8] sm:$0xff]
        %v304 = vld [vmem:[%s244 + $0x10] sm:$0xff]
        %v305 = vld [vmem:[%s244 + $0x18] sm:$0xff]
        %v306 = vld [vmem:[%s244 + $0x20] sm:$0xff]
        %v307 = vld [vmem:[%s244 + $0x28] sm:$0xff]
        %v308 = vld [vmem:[%s244 + $0x30] sm:$0xff]
        %v309 = vld [vmem:[%s244 + $0x38] sm:$0xff]
        %v310 = vld [vmem:[%s244 + $0x40] sm:$0xff]
        %v311 = vld [vmem:[%s244 + $0x48] sm:$0xff]
        %v312 = vld [vmem:[%s244 + $0x50] sm:$0xff]
        %v313 = vld [vmem:[%s244 + $0x58] sm:$0xff]
        %v314 = vld [vmem:[%s244 + $0x60] sm:$0xff]
        %v315 = vld [vmem:[%s244 + $0x68] sm:$0xff]
        %v316 = vld [vmem:[%s244 + $0x70] sm:$0xff]
        %v317 = vld [vmem:[%s244 + $0x78] sm:$0xff]
        %v318 = vpack.c.bf16 %v306, %v302
        %v319 = vpack.c.bf16 %v307, %v303
        %v320 = vpack.c.bf16 %v308, %v304
        %v321 = vpack.c.bf16 %v309, %v305
        %v322 = vpack.c.bf16 %v314, %v310
        %v323 = vpack.c.bf16 %v315, %v311
        %v324 = vpack.c.bf16 %v316, %v312
        %v325 = vpack.c.bf16 %v317, %v313
        %v326 = vld [vmem:[#allocation2] sm:$0xff]
        %327 = vmatpush.bf16.xpose.msra.mxu0 0
        %328 = vmatpush.bf16.xpose.msra.mxu0 0
        %329 = vmatpush.bf16.xpose.msra.mxu0 0
        %330 = vmatpush.bf16.xpose.msra.mxu0 0
        %331 = vmatpush.bf16.xpose.msra.mxu0 0
        %332 = vmatpush.bf16.xpose.msra.mxu0 0
        %333 = vmatpush.bf16.xpose.msra.mxu0 %v322
        %334 = vmatpush.bf16.xpose.msra.mxu0 %v318
        %335 = vmatmul.bf16.gmra.mxu0 %v298
        %v336 = vpop.f32.mrf.mxu0
        %v337 = vadd.f32 0.0, %v336
        %v338 = vpop.f32.mrf.mxu0
        %339 = vdwg.mxu0
        %340 = vmatpush.bf16.xpose.msra.mxu0 0
        %341 = vmatpush.bf16.xpose.msra.mxu0 0
        %342 = vmatpush.bf16.xpose.msra.mxu0 0
        %343 = vmatpush.bf16.xpose.msra.mxu0 0
        %344 = vmatpush.bf16.xpose.msra.mxu0 0
        %345 = vmatpush.bf16.xpose.msra.mxu0 0
        %346 = vmatpush.bf16.xpose.msra.mxu0 %v323
        %347 = vmatpush.bf16.xpose.msra.mxu0 %v319
        %348 = vmatmul.bf16.gmra.mxu0 %v299
        %v349 = vpop.f32.mrf.mxu0
        %v350 = vadd.f32 %v337, %v349
        %v351 = vpop.f32.mrf.mxu0
        %352 = vdwg.mxu0
        %353 = vmatpush.bf16.xpose.msra.mxu0 0
        %354 = vmatpush.bf16.xpose.msra.mxu0 0
        %355 = vmatpush.bf16.xpose.msra.mxu0 0
        %356 = vmatpush.bf16.xpose.msra.mxu0 0
        %357 = vmatpush.bf16.xpose.msra.mxu0 0
        %358 = vmatpush.bf16.xpose.msra.mxu0 0
        %359 = vmatpush.bf16.xpose.msra.mxu0 %v324
        %360 = vmatpush.bf16.xpose.msra.mxu0 %v320
        %361 = vmatmul.bf16.gmra.mxu0 %v300
        %v362 = vpop.f32.mrf.mxu0
        %v363 = vadd.f32 %v350, %v362
        %v364 = vpop.f32.mrf.mxu0
        %365 = vdwg.mxu0
        %366 = vmatpush.bf16.xpose.msra.mxu0 0
        %367 = vmatpush.bf16.xpose.msra.mxu0 0
        %368 = vmatpush.bf16.xpose.msra.mxu0 0
        %369 = vmatpush.bf16.xpose.msra.mxu0 0
        %370 = vmatpush.bf16.xpose.msra.mxu0 0
        %371 = vmatpush.bf16.xpose.msra.mxu0 0
        %372 = vmatpush.bf16.xpose.msra.mxu0 %v325
        %373 = vmatpush.bf16.xpose.msra.mxu0 %v321
        %374 = vmatmul.bf16.gmra.mxu0 %v301
        %v375 = vpop.f32.mrf.mxu0
        %v376 = vadd.f32 %v363, %v375
        %v377 = vpop.f32.mrf.mxu0
        %378 = vdwg.mxu0
        %v379 = vadd.f32 %v326, %v376
        %vm380 = vcmask 261120
        %381 = vst.msk [vmem:[#allocation2] sm:$0xff] %vm380, %v379
        %p382 = scmp.eq.s32.totalorder %s25, 1
        // Predicated region
        $region49: #{tpu_custom_call.1} parent=39 // pred_check
          %p383 = pneg %p382
        $region50: #{tpu_custom_call.1} parent=39 // pred_check_branch
          %385 = sbr.rel (%p383) target = $region52
        $region51: #{tpu_custom_call.1} parent=39 // pred_region
          %v386 = vld [vmem:[#allocation2] sm:$0xff]
          %v387 = vld [vmem:[%s2] sm:$0x1]
          %v389 = vperm.slane %v387, 0
          %v391 = vadd.f32 %v386, %v389
          %v392 = vmax.f32 %v391, 0.0
          %v393 = vld [vmem:[%s3] sm:$0xff]
          %v394 = vld [vmem:[%s3 + $0x8] sm:$0xff]
          %v395 = vld [vmem:[%s3 + $0x10] sm:$0xff]
          %v396 = vld [vmem:[%s3 + $0x18] sm:$0xff]
          %v397 = vld [vmem:[%s3 + $0x20] sm:$0xff]
          %v398 = vld [vmem:[%s3 + $0x28] sm:$0xff]
          %v399 = vld [vmem:[%s3 + $0x30] sm:$0xff]
          %v400 = vld [vmem:[%s3 + $0x38] sm:$0xff]
          %v401 = vld [vmem:[%s3 + $0x40] sm:$0xff]
          %v402 = vld [vmem:[%s3 + $0x48] sm:$0xff]
          %v403 = vld [vmem:[%s3 + $0x50] sm:$0xff]
          %v404 = vld [vmem:[%s3 + $0x58] sm:$0xff]
          %v405 = vld [vmem:[%s3 + $0x60] sm:$0xff]
          %v406 = vld [vmem:[%s3 + $0x68] sm:$0xff]
          %v407 = vld [vmem:[%s3 + $0x70] sm:$0xff]
          %v408 = vld [vmem:[%s3 + $0x78] sm:$0xff]
          %v409 = vld [vmem:[%s4] sm:$0x1]
          %v411 = vperm.slane %v409, 0
          %v414 = vsel %vm380, %v392, 0
          %v417 = vsel %vm380, %v393, 0
          %v420 = vsel %vm380, %v394, 0
          %v423 = vsel %vm380, %v395, 0
          %v426 = vsel %vm380, %v396, 0
          %v429 = vsel %vm380, %v397, 0
          %v432 = vsel %vm380, %v398, 0
          %v435 = vsel %vm380, %v399, 0
          %v438 = vsel %vm380, %v400, 0
          %v441 = vsel %vm380, %v401, 0
          %v444 = vsel %vm380, %v402, 0
          %v447 = vsel %vm380, %v403, 0
          %v450 = vsel %vm380, %v404, 0
          %v453 = vsel %vm380, %v405, 0
          %v456 = vsel %vm380, %v406, 0
          %v459 = vsel %vm380, %v407, 0
          %v462 = vsel %vm380, %v408, 0
          %464 = vmatpush.xpose.msra.mxu0 %v462
          %465 = vmatpush.xpose.msra.mxu0 %v459
          %466 = vmatpush.xpose.msra.mxu0 %v456
          %467 = vmatpush.xpose.msra.mxu0 %v453
          %468 = vmatpush.xpose.msra.mxu0 %v450
          %469 = vmatpush.xpose.msra.mxu0 %v447
          %470 = vmatpush.xpose.msra.mxu0 %v444
          %471 = vmatpush.xpose.msra.mxu0 %v441
          %472 = vmatpush.xpose.msra.mxu0 %v438
          %473 = vmatpush.xpose.msra.mxu0 %v435
          %474 = vmatpush.xpose.msra.mxu0 %v432
          %475 = vmatpush.xpose.msra.mxu0 %v429
          %476 = vmatpush.xpose.msra.mxu0 %v426
          %477 = vmatpush.xpose.msra.mxu0 %v423
          %478 = vmatpush.xpose.msra.mxu0 %v420
          %479 = vmatpush.xpose.msra.mxu0 %v417
          %480 = vmatmul.f32.gmra.mxu0 %v414
          %v481 = vpop.f32.mrf.mxu0
          %v482 = vadd.f32 %v411, %v481
          %483 = vdwg.mxu0
          %484 = vst [vmem:[#allocation6] sm:$0xff] %v482
        $region52: #{tpu_custom_call.1} parent=39 // pred_fallthru
          _
        // Predicated region
        $region53: #{tpu_custom_call.1} parent=39 // pred_check
          %p485 = pneg %p167
        $region54: #{tpu_custom_call.1} parent=39 // pred_check_branch
          %487 = sbr.rel (%p485) target = $region56
        $region55: #{tpu_custom_call.1} parent=39 // pred_region
          %489 = vsyncadd [#allocation5], 0
          %s490 = smul.addr %s24, 8
          %s491 = scalar_lea.hbm %s5, %s490
          %s493 = sshll.u32 [#allocation6], 4
          %s494 = int_to_ptr.vmem [resolvable:$true] %s493
          %s495 = sshll.u32 %s491, 4
          %s496 = int_to_ptr.hbm [resolvable:$true] %s495
          %498 = dma.vmem_to_hbm [thread:$0]  %s494, 128, %s496, [#allocation5]
        $region56: #{tpu_custom_call.1} parent=39 // pred_fallthru
          _
        // Predicated region
        $region57: #{tpu_custom_call.1} parent=39 // pred_check
          %p499 = pneg %p167
        $region58: #{tpu_custom_call.1} parent=39 // pred_check_branch
          %501 = sbr.rel (%p499) target = $region60
        $region59: #{tpu_custom_call.1} parent=39 // pred_region
          %503 = dma.done [#allocation5], 128
        $region60: #{tpu_custom_call.1} parent=39 // pred_fallthru
          _
      $region40: #{tpu_custom_call.1} parent=5 // pred_fallthru
        _
      %p504 = scmp.le.s32.totalorder 2, %s15
      // Predicated region
      $region61: #{tpu_custom_call.1} parent=5 // pred_check
        %p505 = pneg %p504
      $region62: #{tpu_custom_call.1} parent=5 // pred_check_branch
        %507 = sbr.rel (%p505) target = $region64
      $region63: #{tpu_custom_call.1} parent=5 // pred_region
        %s508 = ssub.s32 %s15, 2
      $region64: #{tpu_custom_call.1} parent=5 // pred_fallthru
        _
    $region6: #{tpu_custom_call.1} parent=1 // loop_footer
      %s19 = sadd.s32 1, %s15
    $region7: #{tpu_custom_call.1} parent=1 // loop_footer_branch
      %14 = sbr.rel target = $region3
    $region8: #{tpu_custom_call.1} parent=1 // loop_exit
      _
    %509 = vsyncpa [#allocation4], 1
    %s510 = scalar_lea.sflag [#allocation4], 1
    %511 = vsyncpa %s510, 1
    %512 = vsyncpa [#allocation5], 1
    %s513 = scalar_lea.sflag [#allocation5], 1
    %514 = vsyncpa %s513, 1

</llo_original>
